<compile_context>
chip_gen: v7x
topology: tpu7x:2x2x1
jax: 0.10.0
libtpu: 0.0.40
codegen_flags: <defaults>
</compile_context>

<pallas_src>
import functools
import math

import jax
import jax.numpy as jnp
from jax import lax
from jax.experimental import pallas as pl
from jax.experimental.pallas import tpu as pltpu


def ghost_module_kernel(x_ref, w1_ref, b1_ref, wdw_ref, b2_ref, out_ref, *, H, W):
    # x_ref:   (1, Cin, P)   one batch element, P = H*W on the lane dim
    # w1_ref:  (Ci, Cin)     1x1 primary-conv weight with BN1 scale folded in
    # b1_ref:  (Ci, 1)       folded BN1 bias
    # wdw_ref: (Ci, 9)       depthwise 3x3 weight (row-major taps), BN2 scale folded in
    # b2_ref:  (Ci, 1)       folded BN2 bias
    # out_ref: (1, Oup, P)
    Ci, Cin = w1_ref.shape
    Oup = out_ref.shape[1]
    P = H * W

    x = x_ref[0].astype(jnp.float32)                         # (Cin, P)
    w1 = w1_ref[...].astype(jnp.float32)                     # (Ci, Cin)

    # ---- primary conv (1x1, BN scale folded) as Cin broadcast FMAs on the VPU ----
    acc1 = w1[:, 0:1] * x[0:1, :]                            # (Ci,1)*(1,P) -> (Ci,P)
    for i in range(1, Cin):                                  # static tiny loop
        acc1 = acc1 + w1[:, i:i + 1] * x[i:i + 1, :]
    x1 = jnp.maximum(acc1 + b1_ref[...], 0.0)                # (Ci, P)

    # ---- cheap op: depthwise 3x3 (pad=1, stride=1, BN scale folded) via factored rolls ----
    col = lax.broadcasted_iota(jnp.int32, (Ci, P), 1)        # flattened pixel index (hoisted)
    if W & (W - 1) == 0:
        w_idx = jnp.bitwise_and(col, W - 1)                  # cheap VPU mask (power-of-2 W)
    else:
        w_idx = col % W

    # Column-shifted variants. Destination-column validity masks are periodic in W,
    # so applying them before the (multiple-of-W) row shift is equivalent to after.
    x_l = jnp.where(w_idx >= 1, pltpu.roll(x1, 1, axis=1), 0.0)          # reads x1[p-1]
    x_c = x1
    x_r = jnp.where(w_idx < W - 1, pltpu.roll(x1, P - 1, axis=1), 0.0)   # reads x1[p+1]
    cols = (x_l, x_c, x_r)
    row_mask = {-1: col >= W, 1: col < (H - 1) * W}          # destination-row validity

    wdw = wdw_ref[...].astype(jnp.float32)                   # (Ci, 9)
    acc2 = None
    for dy in range(3):                                      # static 3-row tap loop
        ky = dy - 1
        t = wdw[:, 3 * dy + 0:3 * dy + 1] * cols[0]
        t = t + wdw[:, 3 * dy + 1:3 * dy + 2] * cols[1]
        t = t + wdw[:, 3 * dy + 2:3 * dy + 3] * cols[2]
        if ky != 0:
            t = pltpu.roll(t, (-ky * W) % P, axis=1)         # src pixel row = dst row + ky
            t = jnp.where(row_mask[ky], t, 0.0)
        acc2 = t if acc2 is None else acc2 + t
    x2 = jnp.maximum(acc2 + b2_ref[...], 0.0)                # (Ci, P)

    # ---- concat along channels, slice to Oup, single lane-dense store ----
    if Oup > Ci:
        out = jnp.concatenate([x1, x2[:Oup - Ci]], axis=0)   # (Oup, P)
    else:
        out = x1[:Oup]
    out_ref[0] = out.astype(out_ref.dtype)


def ghost_module_forward(x_nchw, w1, s1, b1, wdw, s2, b2, oup):
    """x_nchw: (N, Cin, H, W); w1: (Ci, Cin); wdw: (Ci, 3, 3); s*/b*: (Ci,).
    Returns (N, oup, H, W)."""
    N, Cin, H, W = x_nchw.shape
    Ci = w1.shape[0]
    P = H * W
    # Kernel implements the ratio==2 case (channel-multiplier-1 depthwise).
    # TODO(synk): generalize the cheap-op to channel multipliers > 1 (ratio > 2).
    assert wdw.shape == (Ci, 3, 3) and Ci <= oup <= 2 * Ci

    # Fold BN scales into the conv weights; only bias adds remain in-kernel.
    w1f = (w1 * s1[:, None]).astype(jnp.float32)                          # (Ci, Cin)
    b1c = b1.reshape(Ci, 1).astype(jnp.float32)
    wdwf = (wdw * s2[:, None, None]).reshape(Ci, 9).astype(jnp.float32)   # (Ci, 9)
    b2c = b2.reshape(Ci, 1).astype(jnp.float32)

    x3 = x_nchw.reshape(N, Cin, P)                                        # free NCHW reshape

    out3 = pl.pallas_call(
        functools.partial(ghost_module_kernel, H=H, W=W),
        out_shape=jax.ShapeDtypeStruct((N, oup, P), x_nchw.dtype),
        grid_spec=pltpu.PrefetchScalarGridSpec(
            num_scalar_prefetch=0,
            grid=(N,),
            in_specs=[
                pl.BlockSpec((1, Cin, P), lambda n: (n, 0, 0)),
                pl.BlockSpec((Ci, Cin), lambda n: (0, 0)),
                pl.BlockSpec((Ci, 1), lambda n: (0, 0)),
                pl.BlockSpec((Ci, 9), lambda n: (0, 0)),
                pl.BlockSpec((Ci, 1), lambda n: (0, 0)),
            ],
            out_specs=pl.BlockSpec((1, oup, P), lambda n: (n, 0, 0)),
        ),
        compiler_params=pltpu.CompilerParams(dimension_semantics=("parallel",)),
    )(x3, w1f, b1c, wdwf, b2c)

    return out3.reshape(N, oup, H, W)


def reference_forward(x, w1_oihw, s1, b1, wdw_oihw, s2, b2, oup):
    """Pure-JAX reference (NCHW, PyTorch semantics, BN folded into scale/bias)."""
    x1 = lax.conv_general_dilated(
        x, w1_oihw, (1, 1), 'VALID',
        dimension_numbers=('NCHW', 'OIHW', 'NCHW'),
        precision=lax.Precision.HIGHEST)
    x1 = jnp.maximum(x1 * s1[None, :, None, None] + b1[None, :, None, None], 0.0)
    x2 = lax.conv_general_dilated(
        x1, wdw_oihw, (1, 1), 'SAME',
        feature_group_count=x1.shape[1],
        dimension_numbers=('NCHW', 'OIHW', 'NCHW'),
        precision=lax.Precision.HIGHEST)
    x2 = jnp.maximum(x2 * s2[None, :, None, None] + b2[None, :, None, None], 0.0)
    out = jnp.concatenate([x1, x2], axis=1)
    return out[:, :oup]


if __name__ == "__main__":
    # Module config: GhostModule(inp=4, oup=8, kernel_size=1, ratio=2, dw_size=3, stride=1, relu=True)
    inp, oup, ratio, dw_size = 4, 8, 2, 3
    init_ch = math.ceil(oup / ratio)          # 4
    new_ch = init_ch * (ratio - 1)            # 4
    assert ratio == 2 and new_ch == init_ch   # kernel implements channel-multiplier-1 depthwise
    N, H, W = 2, 16, 16
    eps = 1e-5

    keys = jax.random.split(jax.random.PRNGKey(0), 11)
    x = jax.random.normal(keys[0], (N, inp, H, W), jnp.float32)

    # primary 1x1 conv weight, PyTorch layout (init_ch, inp, 1, 1)
    w1_oihw = 0.5 * jax.random.normal(keys[1], (init_ch, inp, 1, 1), jnp.float32)
    w1 = w1_oihw[:, :, 0, 0]                                   # (init_ch, inp)

    # BN1 params -> folded scale/bias (inference form)
    g1 = 1.0 + 0.1 * jax.random.normal(keys[2], (init_ch,), jnp.float32)
    beta1 = 0.1 * jax.random.normal(keys[3], (init_ch,), jnp.float32)
    mean1 = 0.1 * jax.random.normal(keys[4], (init_ch,), jnp.float32)
    var1 = jnp.abs(jax.random.normal(keys[5], (init_ch,), jnp.float32)) + 0.5
    s1 = g1 / jnp.sqrt(var1 + eps)
    b1 = beta1 - mean1 * s1

    # depthwise 3x3 conv weight, PyTorch layout (new_ch, 1, 3, 3), groups=init_ch
    wdw_oihw = 0.5 * jax.random.normal(keys[6], (new_ch, 1, dw_size, dw_size), jnp.float32)
    wdw = wdw_oihw[:, 0]                                       # (new_ch, 3, 3)

    # BN2 params -> folded scale/bias
    g2 = 1.0 + 0.1 * jax.random.normal(keys[7], (new_ch,), jnp.float32)
    beta2 = 0.1 * jax.random.normal(keys[8], (new_ch,), jnp.float32)
    mean2 = 0.1 * jax.random.normal(keys[9], (new_ch,), jnp.float32)
    var2 = jnp.abs(jax.random.normal(keys[10], (new_ch,), jnp.float32)) + 0.5
    s2 = g2 / jnp.sqrt(var2 + eps)
    b2 = beta2 - mean2 * s2

    out = ghost_module_forward(x, w1, s1, b1, wdw, s2, b2, oup)
    out = jax.block_until_ready(out)

    ref = reference_forward(x, w1_oihw, s1, b1, wdw_oihw, s2, b2, oup)
    assert out.shape == (N, oup, H, W), out.shape
    assert jnp.allclose(out, ref, atol=1e-4, rtol=1e-4), float(jnp.max(jnp.abs(out - ref)))

    print("KERNEL_OK")
</pallas_src>

<mosaic_0001>
module attributes {stable_mosaic.version = 11 : i64} {
  func.func @ghost_module_kernel(%arg0: i32, %arg1: memref<1x4x256xf32, #tpu.memory_space<vmem>>, %arg2: memref<4x4xf32, #tpu.memory_space<vmem>>, %arg3: memref<4x1xf32, #tpu.memory_space<vmem>>, %arg4: memref<4x9xf32, #tpu.memory_space<vmem>>, %arg5: memref<4x1xf32, #tpu.memory_space<vmem>>, %arg6: memref<1x8x256xf32, #tpu.memory_space<vmem>>) attributes {dimension_semantics = [#tpu.dimension_semantics<parallel>], iteration_bounds = array<i64: 2>, scalar_prefetch = 0 : i64, scratch_operands = 0 : i64, tpu.core_type = #tpu.core_type<tc>, window_params = [{transform_indices = @transform_0, window_bounds = array<i64: 1, 4, 256>}, {pipeline_mode = #tpu.pipeline_mode<synchronous>, transform_indices = @transform_1, window_bounds = array<i64: 4, 4>}, {pipeline_mode = #tpu.pipeline_mode<synchronous>, transform_indices = @transform_2, window_bounds = array<i64: 4, 1>}, {pipeline_mode = #tpu.pipeline_mode<synchronous>, transform_indices = @transform_3, window_bounds = array<i64: 4, 9>}, {pipeline_mode = #tpu.pipeline_mode<synchronous>, transform_indices = @transform_4, window_bounds = array<i64: 4, 1>}, {transform_indices = @transform_5, window_bounds = array<i64: 1, 8, 256>}]} {
    %c0 = arith.constant 0 : index
    %c0_0 = arith.constant 0 : index
    %c0_1 = arith.constant 0 : index
    %0 = vector.load %arg1[%c0, %c0_0, %c0_1] : memref<1x4x256xf32, #tpu.memory_space<vmem>>, vector<1x4x256xf32>
    %1 = vector.shape_cast %0 : vector<1x4x256xf32> to vector<4x256xf32>
    %c0_2 = arith.constant 0 : index
    %c0_3 = arith.constant 0 : index
    %2 = vector.load %arg2[%c0_2, %c0_3] : memref<4x4xf32, #tpu.memory_space<vmem>>, vector<4x4xf32>
    %3 = vector.extract_strided_slice %2 {offsets = [0, 0], sizes = [4, 1], strides = [1, 1]} : vector<4x4xf32> to vector<4x1xf32>
    %4 = vector.extract_strided_slice %1 {offsets = [0, 0], sizes = [1, 256], strides = [1, 1]} : vector<4x256xf32> to vector<1x256xf32>
    %5 = vector.broadcast %3 : vector<4x1xf32> to vector<4x256xf32>
    %6 = vector.broadcast %4 : vector<1x256xf32> to vector<4x256xf32>
    %7 = arith.mulf %5, %6 : vector<4x256xf32>
    %8 = vector.extract_strided_slice %2 {offsets = [0, 1], sizes = [4, 1], strides = [1, 1]} : vector<4x4xf32> to vector<4x1xf32>
    %9 = vector.extract_strided_slice %1 {offsets = [1, 0], sizes = [1, 256], strides = [1, 1]} : vector<4x256xf32> to vector<1x256xf32>
    %10 = vector.broadcast %8 : vector<4x1xf32> to vector<4x256xf32>
    %11 = vector.broadcast %9 : vector<1x256xf32> to vector<4x256xf32>
    %12 = arith.mulf %10, %11 : vector<4x256xf32>
    %13 = arith.addf %7, %12 : vector<4x256xf32>
    %14 = vector.extract_strided_slice %2 {offsets = [0, 2], sizes = [4, 1], strides = [1, 1]} : vector<4x4xf32> to vector<4x1xf32>
    %15 = vector.extract_strided_slice %1 {offsets = [2, 0], sizes = [1, 256], strides = [1, 1]} : vector<4x256xf32> to vector<1x256xf32>
    %16 = vector.broadcast %14 : vector<4x1xf32> to vector<4x256xf32>
    %17 = vector.broadcast %15 : vector<1x256xf32> to vector<4x256xf32>
    %18 = arith.mulf %16, %17 : vector<4x256xf32>
    %19 = arith.addf %13, %18 : vector<4x256xf32>
    %20 = vector.extract_strided_slice %2 {offsets = [0, 3], sizes = [4, 1], strides = [1, 1]} : vector<4x4xf32> to vector<4x1xf32>
    %21 = vector.extract_strided_slice %1 {offsets = [3, 0], sizes = [1, 256], strides = [1, 1]} : vector<4x256xf32> to vector<1x256xf32>
    %22 = vector.broadcast %20 : vector<4x1xf32> to vector<4x256xf32>
    %23 = vector.broadcast %21 : vector<1x256xf32> to vector<4x256xf32>
    %24 = arith.mulf %22, %23 : vector<4x256xf32>
    %25 = arith.addf %19, %24 : vector<4x256xf32>
    %c0_4 = arith.constant 0 : index
    %c0_5 = arith.constant 0 : index
    %26 = vector.load %arg3[%c0_4, %c0_5] : memref<4x1xf32, #tpu.memory_space<vmem>>, vector<4x1xf32>
    %27 = vector.broadcast %26 : vector<4x1xf32> to vector<4x256xf32>
    %28 = arith.addf %25, %27 : vector<4x256xf32>
    %cst = arith.constant 0.000000e+00 : f32
    %29 = vector.broadcast %cst : f32 to vector<4x256xf32>
    %30 = arith.maximumf %28, %29 : vector<4x256xf32>
    %31 = tpu.iota {dimensions = array<i32: 1>} : vector<4x256xi32>
    %c15_i32 = arith.constant 15 : i32
    %32 = vector.broadcast %c15_i32 : i32 to vector<4x256xi32>
    %33 = arith.andi %31, %32 : vector<4x256xi32>
    %c1_i32 = arith.constant 1 : i32
    %34 = vector.broadcast %c1_i32 : i32 to vector<4x256xi32>
    %35 = arith.cmpi sge, %33, %34 : vector<4x256xi32>
    %c1_i32_6 = arith.constant 1 : i32
    %36 = tpu.dynamic_rotate %30 by %c1_i32_6 dim 1 : vector<4x256xf32>, i32 -> vector<4x256xf32>
    %cst_7 = arith.constant 0.000000e+00 : f32
    %37 = vector.broadcast %cst_7 : f32 to vector<4x256xf32>
    %38 = arith.select %35, %36, %37 : vector<4x256xi1>, vector<4x256xf32>
    %c15_i32_8 = arith.constant 15 : i32
    %39 = vector.broadcast %c15_i32_8 : i32 to vector<4x256xi32>
    %40 = arith.cmpi slt, %33, %39 : vector<4x256xi32>
    %c255_i32 = arith.constant 255 : i32
    %41 = tpu.dynamic_rotate %30 by %c255_i32 dim 1 : vector<4x256xf32>, i32 -> vector<4x256xf32>
    %cst_9 = arith.constant 0.000000e+00 : f32
    %42 = vector.broadcast %cst_9 : f32 to vector<4x256xf32>
    %43 = arith.select %40, %41, %42 : vector<4x256xi1>, vector<4x256xf32>
    %c16_i32 = arith.constant 16 : i32
    %44 = vector.broadcast %c16_i32 : i32 to vector<4x256xi32>
    %45 = arith.cmpi sge, %31, %44 : vector<4x256xi32>
    %c240_i32 = arith.constant 240 : i32
    %46 = vector.broadcast %c240_i32 : i32 to vector<4x256xi32>
    %47 = arith.cmpi slt, %31, %46 : vector<4x256xi32>
    %c0_10 = arith.constant 0 : index
    %c0_11 = arith.constant 0 : index
    %48 = vector.load %arg4[%c0_10, %c0_11] : memref<4x9xf32, #tpu.memory_space<vmem>>, vector<4x9xf32>
    %49 = vector.extract_strided_slice %48 {offsets = [0, 0], sizes = [4, 1], strides = [1, 1]} : vector<4x9xf32> to vector<4x1xf32>
    %50 = vector.broadcast %49 : vector<4x1xf32> to vector<4x256xf32>
    %51 = arith.mulf %50, %38 : vector<4x256xf32>
    %52 = vector.extract_strided_slice %48 {offsets = [0, 1], sizes = [4, 1], strides = [1, 1]} : vector<4x9xf32> to vector<4x1xf32>
    %53 = vector.broadcast %52 : vector<4x1xf32> to vector<4x256xf32>
    %54 = arith.mulf %53, %30 : vector<4x256xf32>
    %55 = arith.addf %51, %54 : vector<4x256xf32>
    %56 = vector.extract_strided_slice %48 {offsets = [0, 2], sizes = [4, 1], strides = [1, 1]} : vector<4x9xf32> to vector<4x1xf32>
    %57 = vector.broadcast %56 : vector<4x1xf32> to vector<4x256xf32>
    %58 = arith.mulf %57, %43 : vector<4x256xf32>
    %59 = arith.addf %55, %58 : vector<4x256xf32>
    %c16_i32_12 = arith.constant 16 : i32
    %60 = tpu.dynamic_rotate %59 by %c16_i32_12 dim 1 : vector<4x256xf32>, i32 -> vector<4x256xf32>
    %cst_13 = arith.constant 0.000000e+00 : f32
    %61 = vector.broadcast %cst_13 : f32 to vector<4x256xf32>
    %62 = arith.select %45, %60, %61 : vector<4x256xi1>, vector<4x256xf32>
    %63 = vector.extract_strided_slice %48 {offsets = [0, 3], sizes = [4, 1], strides = [1, 1]} : vector<4x9xf32> to vector<4x1xf32>
    %64 = vector.broadcast %63 : vector<4x1xf32> to vector<4x256xf32>
    %65 = arith.mulf %64, %38 : vector<4x256xf32>
    %66 = vector.extract_strided_slice %48 {offsets = [0, 4], sizes = [4, 1], strides = [1, 1]} : vector<4x9xf32> to vector<4x1xf32>
    %67 = vector.broadcast %66 : vector<4x1xf32> to vector<4x256xf32>
    %68 = arith.mulf %67, %30 : vector<4x256xf32>
    %69 = arith.addf %65, %68 : vector<4x256xf32>
    %70 = vector.extract_strided_slice %48 {offsets = [0, 5], sizes = [4, 1], strides = [1, 1]} : vector<4x9xf32> to vector<4x1xf32>
    %71 = vector.broadcast %70 : vector<4x1xf32> to vector<4x256xf32>
    %72 = arith.mulf %71, %43 : vector<4x256xf32>
    %73 = arith.addf %69, %72 : vector<4x256xf32>
    %74 = arith.addf %62, %73 : vector<4x256xf32>
    %75 = vector.extract_strided_slice %48 {offsets = [0, 6], sizes = [4, 1], strides = [1, 1]} : vector<4x9xf32> to vector<4x1xf32>
    %76 = vector.broadcast %75 : vector<4x1xf32> to vector<4x256xf32>
    %77 = arith.mulf %76, %38 : vector<4x256xf32>
    %78 = vector.extract_strided_slice %48 {offsets = [0, 7], sizes = [4, 1], strides = [1, 1]} : vector<4x9xf32> to vector<4x1xf32>
    %79 = vector.broadcast %78 : vector<4x1xf32> to vector<4x256xf32>
    %80 = arith.mulf %79, %30 : vector<4x256xf32>
    %81 = arith.addf %77, %80 : vector<4x256xf32>
    %82 = vector.extract_strided_slice %48 {offsets = [0, 8], sizes = [4, 1], strides = [1, 1]} : vector<4x9xf32> to vector<4x1xf32>
    %83 = vector.broadcast %82 : vector<4x1xf32> to vector<4x256xf32>
    %84 = arith.mulf %83, %43 : vector<4x256xf32>
    %85 = arith.addf %81, %84 : vector<4x256xf32>
    %c240_i32_14 = arith.constant 240 : i32
    %86 = tpu.dynamic_rotate %85 by %c240_i32_14 dim 1 : vector<4x256xf32>, i32 -> vector<4x256xf32>
    %cst_15 = arith.constant 0.000000e+00 : f32
    %87 = vector.broadcast %cst_15 : f32 to vector<4x256xf32>
    %88 = arith.select %47, %86, %87 : vector<4x256xi1>, vector<4x256xf32>
    %89 = arith.addf %74, %88 : vector<4x256xf32>
    %c0_16 = arith.constant 0 : index
    %c0_17 = arith.constant 0 : index
    %90 = vector.load %arg5[%c0_16, %c0_17] : memref<4x1xf32, #tpu.memory_space<vmem>>, vector<4x1xf32>
    %91 = vector.broadcast %90 : vector<4x1xf32> to vector<4x256xf32>
    %92 = arith.addf %89, %91 : vector<4x256xf32>
    %cst_18 = arith.constant 0.000000e+00 : f32
    %93 = vector.broadcast %cst_18 : f32 to vector<4x256xf32>
    %94 = arith.maximumf %92, %93 : vector<4x256xf32>
    %95 = tpu.concatenate %30, %94 in 0 : vector<4x256xf32>, vector<4x256xf32> -> vector<8x256xf32>
    %c0_19 = arith.constant 0 : index
    %c0_20 = arith.constant 0 : index
    %c0_21 = arith.constant 0 : index
    %96 = vector.load %arg6[%c0_19, %c0_20, %c0_21] : memref<1x8x256xf32, #tpu.memory_space<vmem>>, vector<1x8x256xf32>
    %97 = vector.shape_cast %96 : vector<1x8x256xf32> to vector<8x256xf32>
    %98 = vector.shape_cast %95 : vector<8x256xf32> to vector<1x8x256xf32>
    tpu.vector_store %arg6[%c0_19, %c0_20, %c0_21], %98 {strides = array<i32>} : memref<1x8x256xf32, #tpu.memory_space<vmem>>, vector<1x8x256xf32>,
    return
  }
  func.func @transform_0(%arg0: i32) -> (i32, i32, i32) {
    %c0_i32 = arith.constant 0 : i32
    %c0_i32_0 = arith.constant 0 : i32
    %c0_i32_1 = arith.constant 0 : i32
    return %arg0, %c0_i32, %c0_i32_0 : i32, i32, i32
  }
  func.func @transform_1(%arg0: i32) -> (i32, i32) {
    %c0_i32 = arith.constant 0 : i32
    %c0_i32_0 = arith.constant 0 : i32
    %c0_i32_1 = arith.constant 0 : i32
    return %c0_i32, %c0_i32_0 : i32, i32
  }
  func.func @transform_2(%arg0: i32) -> (i32, i32) {
    %c0_i32 = arith.constant 0 : i32
    %c0_i32_0 = arith.constant 0 : i32
    %c0_i32_1 = arith.constant 0 : i32
    return %c0_i32, %c0_i32_0 : i32, i32
  }
  func.func @transform_3(%arg0: i32) -> (i32, i32) {
    %c0_i32 = arith.constant 0 : i32
    %c0_i32_0 = arith.constant 0 : i32
    %c0_i32_1 = arith.constant 0 : i32
    return %c0_i32, %c0_i32_0 : i32, i32
  }
  func.func @transform_4(%arg0: i32) -> (i32, i32) {
    %c0_i32 = arith.constant 0 : i32
    %c0_i32_0 = arith.constant 0 : i32
    %c0_i32_1 = arith.constant 0 : i32
    return %c0_i32, %c0_i32_0 : i32, i32
  }
  func.func @transform_5(%arg0: i32) -> (i32, i32, i32) {
    %c0_i32 = arith.constant 0 : i32
    %c0_i32_0 = arith.constant 0 : i32
    %c0_i32_1 = arith.constant 0 : i32
    return %arg0, %c0_i32, %c0_i32_0 : i32, i32, i32
  }
}

</mosaic_0001>

<llo_original>
// kernel: tpu_custom_call.1
$region0: #{tpu_custom_call.1}
  #allocation0 [shape = 'u32[]', space=smem, size = 0x4, offset = 0x4, fixed_abs, tag = 'smem constant byte address 0x4 - core index']
  #allocation1 [shape = 'u32[144,128]{1,0:T(1,128)}', space=vmem, size = 0x12000, scoped, tag = 'internal scratch']
  %s0 = inlined_call_operand.hbm [shape: f32[2,4,256], index: 0, kind: input, shape index: {}]
  %s1 = inlined_call_operand.vmem [shape: f32[4,4], index: 1, kind: input, shape index: {}]
  %s2 = inlined_call_operand.vmem [shape: f32[4,1], index: 2, kind: input, shape index: {}]
  %s3 = inlined_call_operand.vmem [shape: f32[4,9], index: 3, kind: input, shape index: {}]
  %s4 = inlined_call_operand.vmem [shape: f32[4,1], index: 4, kind: input, shape index: {}]
  %s5 = inlined_call_operand.hbm [shape: f32[2,8,256], index: 5, kind: output, shape index: {}]
  %s6 = sld [smem:[#allocation0]]
  $region57: #{tpu_custom_call.1} parent=0
    _
  %s8 = ssub.s32 1, %s6
  %s9 = scalar_select 0, %s8, %s6
  $region1: #{tpu_custom_call.1} parent=0
    #allocation2 [shape = 'u8[8192]{0}', space=vmem, size = 0x2000, scoped, tag = 'input window, operand 0']
    #allocation3 [shape = 's32[2]{0}', space=sflag, size = 0x8, scoped, tag = 'scoped memory for tpu_custom_call.1']
    #allocation4 [shape = 's32[2]{0}', space=sflag, size = 0x8, scoped, tag = 'scoped memory for tpu_custom_call.1']
    #allocation5 [shape = 'u8[16384]{0}', space=vmem, size = 0x4000, scoped, tag = 'output window, operand 0']
    %10 = vsyncpa [#allocation3], 0
    %s11 = scalar_lea.sflag [#allocation3], 1
    %12 = vsyncpa %s11, 0
    %13 = vsyncpa [#allocation4], 0
    %s14 = scalar_lea.sflag [#allocation4], 1
    %15 = vsyncpa %s14, 0
    loop: start=0, step=1, limit=4
    $region2: #{tpu_custom_call.1} parent=1 // loop_pre_header
      _
    $region3: #{tpu_custom_call.1} parent=1 // loop_header
      %s17 = sphi 0, %s21
      %p18 = scmp.ge.s32.totalorder %s17, 4
      %s27 = sphi 0, %s29
      %s30 = sphi 0, %s27
      %s31 = sphi 0, %s30
      %s47 = sphi 0, %s31
      %s51 = sphi 0, %s51
      %s53 = sphi 0, %s51
      %s54 = sphi 0, %s53
      %s68 = sphi 0, %s54
      %s72 = sphi 0, %s72
      %s74 = sphi 0, %s72
      %s75 = sphi 0, %s74
      %s89 = sphi 0, %s75
      %s93 = sphi 0, %s93
      %s95 = sphi 0, %s93
      %s96 = sphi 0, %s95
      %s110 = sphi 0, %s96
      %s114 = sphi 0, %s114
      %s116 = sphi 0, %s114
      %s117 = sphi 0, %s116
      %s131 = sphi 0, %s117
      %s137 = sphi 0, %s139
      %s140 = sphi 0, %s137
      %s141 = sphi 0, %s140
      %s157 = sphi 0, %s141
    $region4: #{tpu_custom_call.1} parent=1 // loop_header_branch
      %20 = sbr.rel (%p18) target = $region8
    $region5: #{tpu_custom_call.1} parent=1 // loop_body
      %s22 = ssub.s32 %s17, 1
      %s23 = ssub.s32 %s17, 2
      %s24 = sadd.s32 %s17, 1
      %s25 = ssub.s32 %s17, %s24
      %p26 = scmp.eq.s32.totalorder %s25, 0
      %s28 = sadd.s32 %s27, 1
      %s29 = scalar_select %p26, %s27, %s28
      %p32 = pneg %p26
      %p33 = scmp.eq.s32.totalorder %s17, 1
      %p34 = por %p32, %p33
      %p35 = scmp.ne.s32.totalorder %s27, %s30
      %p36 = scmp.eq.s32.totalorder %s17, 0
      %p37 = por %p35, %p36
      %p38 = scmp.ne.s32.totalorder %s27, %s30
      %p39 = scmp.eq.s32.totalorder %s22, 1
      %p40 = por %p38, %p39
      %p41 = scmp.ne.s32.totalorder %s30, %s31
      %p42 = scmp.eq.s32.totalorder %s22, 0
      %p43 = por %p41, %p42
      %p44 = scmp.ne.s32.totalorder %s30, %s31
      %p45 = scmp.eq.s32.totalorder %s23, 1
      %p46 = por %p44, %p45
      %p48 = scmp.ne.s32.totalorder %s31, %s47
      %p49 = scmp.eq.s32.totalorder %s23, 0
      %p50 = por %p48, %p49
      %s52 = sadd.s32 %s51, 1
      %p55 = scmp.eq.s32.totalorder %s17, 1
      %p56 = scmp.ne.s32.totalorder %s51, %s53
      %p57 = scmp.eq.s32.totalorder %s17, 0
      %p58 = por %p56, %p57
      %p59 = scmp.ne.s32.totalorder %s51, %s53
      %p60 = scmp.eq.s32.totalorder %s22, 1
      %p61 = por %p59, %p60
      %p62 = scmp.ne.s32.totalorder %s53, %s54
      %p63 = scmp.eq.s32.totalorder %s22, 0
      %p64 = por %p62, %p63
      %p65 = scmp.ne.s32.totalorder %s53, %s54
      %p66 = scmp.eq.s32.totalorder %s23, 1
      %p67 = por %p65, %p66
      %p69 = scmp.ne.s32.totalorder %s54, %s68
      %p70 = scmp.eq.s32.totalorder %s23, 0
      %p71 = por %p69, %p70
      %s73 = sadd.s32 %s72, 1
      %p76 = scmp.eq.s32.totalorder %s17, 1
      %p77 = scmp.ne.s32.totalorder %s72, %s74
      %p78 = scmp.eq.s32.totalorder %s17, 0
      %p79 = por %p77, %p78
      %p80 = scmp.ne.s32.totalorder %s72, %s74
      %p81 = scmp.eq.s32.totalorder %s22, 1
      %p82 = por %p80, %p81
      %p83 = scmp.ne.s32.totalorder %s74, %s75
      %p84 = scmp.eq.s32.totalorder %s22, 0
      %p85 = por %p83, %p84
      %p86 = scmp.ne.s32.totalorder %s74, %s75
      %p87 = scmp.eq.s32.totalorder %s23, 1
      %p88 = por %p86, %p87
      %p90 = scmp.ne.s32.totalorder %s75, %s89
      %p91 = scmp.eq.s32.totalorder %s23, 0
      %p92 = por %p90, %p91
      %s94 = sadd.s32 %s93, 1
      %p97 = scmp.eq.s32.totalorder %s17, 1
      %p98 = scmp.ne.s32.totalorder %s93, %s95
      %p99 = scmp.eq.s32.totalorder %s17, 0
      %p100 = por %p98, %p99
      %p101 = scmp.ne.s32.totalorder %s93, %s95
      %p102 = scmp.eq.s32.totalorder %s22, 1
      %p103 = por %p101, %p102
      %p104 = scmp.ne.s32.totalorder %s95, %s96
      %p105 = scmp.eq.s32.totalorder %s22, 0
      %p106 = por %p104, %p105
      %p107 = scmp.ne.s32.totalorder %s95, %s96
      %p108 = scmp.eq.s32.totalorder %s23, 1
      %p109 = por %p107, %p108
      %p111 = scmp.ne.s32.totalorder %s96, %s110
      %p112 = scmp.eq.s32.totalorder %s23, 0
      %p113 = por %p111, %p112
      %s115 = sadd.s32 %s114, 1
      %p118 = scmp.eq.s32.totalorder %s17, 1
      %p119 = scmp.ne.s32.totalorder %s114, %s116
      %p120 = scmp.eq.s32.totalorder %s17, 0
      %p121 = por %p119, %p120
      %p122 = scmp.ne.s32.totalorder %s114, %s116
      %p123 = scmp.eq.s32.totalorder %s22, 1
      %p124 = por %p122, %p123
      %p125 = scmp.ne.s32.totalorder %s116, %s117
      %p126 = scmp.eq.s32.totalorder %s22, 0
      %p127 = por %p125, %p126
      %p128 = scmp.ne.s32.totalorder %s116, %s117
      %p129 = scmp.eq.s32.totalorder %s23, 1
      %p130 = por %p128, %p129
      %p132 = scmp.ne.s32.totalorder %s117, %s131
      %p133 = scmp.eq.s32.totalorder %s23, 0
      %p134 = por %p132, %p133
      %s135 = ssub.s32 %s17, %s24
      %p136 = scmp.eq.s32.totalorder %s135, 0
      %s138 = sadd.s32 %s137, 1
      %s139 = scalar_select %p136, %s137, %s138
      %p142 = pneg %p136
      %p143 = scmp.eq.s32.totalorder %s17, 1
      %p144 = por %p142, %p143
      %p145 = scmp.ne.s32.totalorder %s137, %s140
      %p146 = scmp.eq.s32.totalorder %s17, 0
      %p147 = por %p145, %p146
      %p148 = scmp.ne.s32.totalorder %s137, %s140
      %p149 = scmp.eq.s32.totalorder %s22, 1
      %p150 = por %p148, %p149
      %p151 = scmp.ne.s32.totalorder %s140, %s141
      %p152 = scmp.eq.s32.totalorder %s22, 0
      %p153 = por %p151, %p152
      %p154 = scmp.ne.s32.totalorder %s140, %s141
      %p155 = scmp.eq.s32.totalorder %s23, 1
      %p156 = por %p154, %p155
      %p158 = scmp.ne.s32.totalorder %s141, %s157
      %p159 = scmp.eq.s32.totalorder %s23, 0
      %p160 = por %p158, %p159
      %p161 = scmp.le.s32.totalorder 1, %s17
      %p162 = scmp.lt.s32.totalorder %s17, 3
      %p163 = pnand %p161, %p162
      %p164 = pneg %p163
      // Predicated region
      $region9: #{tpu_custom_call.1} parent=5 // pred_check
        _
      $region10: #{tpu_custom_call.1} parent=5 // pred_check_branch
        %166 = sbr.rel (%p163) target = $region12
      $region11: #{tpu_custom_call.1} parent=5 // pred_region
        %s167 = ssub.s32 %s17, 1
        // Predicated region
        $region13: #{tpu_custom_call.1} parent=11 // pred_check
          %p168 = pneg %p64
        $region14: #{tpu_custom_call.1} parent=11 // pred_check_branch
          %170 = sbr.rel (%p168) target = $region16
        $region15: #{tpu_custom_call.1} parent=11 // pred_region
          _
        $region16: #{tpu_custom_call.1} parent=11 // pred_fallthru
          _
        // Predicated region
        $region17: #{tpu_custom_call.1} parent=11 // pred_check
          %p171 = pneg %p85
        $region18: #{tpu_custom_call.1} parent=11 // pred_check_branch
          %173 = sbr.rel (%p171) target = $region20
        $region19: #{tpu_custom_call.1} parent=11 // pred_region
          _
        $region20: #{tpu_custom_call.1} parent=11 // pred_fallthru
          _
        // Predicated region
        $region21: #{tpu_custom_call.1} parent=11 // pred_check
          %p174 = pneg %p106
        $region22: #{tpu_custom_call.1} parent=11 // pred_check_branch
          %176 = sbr.rel (%p174) target = $region24
        $region23: #{tpu_custom_call.1} parent=11 // pred_region
          _
        $region24: #{tpu_custom_call.1} parent=11 // pred_fallthru
          _
        // Predicated region
        $region25: #{tpu_custom_call.1} parent=11 // pred_check
          %p177 = pneg %p127
        $region26: #{tpu_custom_call.1} parent=11 // pred_check_branch
          %179 = sbr.rel (%p177) target = $region28
        $region27: #{tpu_custom_call.1} parent=11 // pred_region
          _
        $region28: #{tpu_custom_call.1} parent=11 // pred_fallthru
          _
      $region12: #{tpu_custom_call.1} parent=5 // pred_fallthru
        _
      %p180 = scmp.lt.s32.totalorder %s17, 2
      // Predicated region
      $region29: #{tpu_custom_call.1} parent=5 // pred_check
        %p181 = pneg %p180
      $region30: #{tpu_custom_call.1} parent=5 // pred_check_branch
        %183 = sbr.rel (%p181) target = $region32
      $region31: #{tpu_custom_call.1} parent=5 // pred_region
        // Predicated region
        $region33: #{tpu_custom_call.1} parent=31 // pred_check
          %p184 = pneg %p37
        $region34: #{tpu_custom_call.1} parent=31 // pred_check_branch
          %186 = sbr.rel (%p184) target = $region36
        $region35: #{tpu_custom_call.1} parent=31 // pred_region
          %s187 = sand.u32 %s27, 1
          %s188 = scalar_lea.sflag [#allocation3], %s187
          %s189 = sand.u32 %s27, 1
          %s190 = smul.addr %s189, 8
          %s191 = scalar_lea.vmem [#allocation2], %s190
          %s193 = ssub.s32 128, 128
          %194 = vsyncadd %s188, %s193
          %s195 = smul.addr %s17, 2
          %s196 = smul.addr %s195, 64
          %s197 = scalar_lea.hbm %s0, %s196
          %s199 = sshll.u32 %s191, 4
          %s200 = int_to_ptr.vmem [resolvable:$true] %s199
          %202 = dma.hbm_to_vmem [thread:$0]  %s197, 128, %s200, %s188
        $region36: #{tpu_custom_call.1} parent=31 // pred_fallthru
          _
      $region32: #{tpu_custom_call.1} parent=5 // pred_fallthru
        _
      %p203 = scmp.le.s32.totalorder 1, %s17
      %p204 = scmp.lt.s32.totalorder %s17, 3
      %p205 = pnand %p203, %p204
      %p206 = pneg %p205
      // Predicated region
      $region37: #{tpu_custom_call.1} parent=5 // pred_check
        _
      $region38: #{tpu_custom_call.1} parent=5 // pred_check_branch
        %208 = sbr.rel (%p205) target = $region40
      $region39: #{tpu_custom_call.1} parent=5 // pred_region
        %s209 = ssub.s32 %s17, 1
        %s210 = sand.u32 %s30, 1
        %s211 = scalar_lea.sflag [#allocation3], %s210
        %s212 = sand.u32 %s30, 1
        %s213 = smul.addr %s212, 8
        %s214 = scalar_lea.vmem [#allocation2], %s213
        // Predicated region
        $region41: #{tpu_custom_call.1} parent=39 // pred_check
          %p215 = pneg %p43
        $region42: #{tpu_custom_call.1} parent=39 // pred_check_branch
          %217 = sbr.rel (%p215) target = $region44
        $region43: #{tpu_custom_call.1} parent=39 // pred_region
          %218 = dma.done %s211, 128
        $region44: #{tpu_custom_call.1} parent=39 // pred_fallthru
          _
        %s219 = sand.u32 %s30, 1
        %s220 = scalar_lea.sflag [#allocation3], %s219
        %s221 = sand.u32 %s30, 1
        %s222 = smul.addr %s221, 8
        %s223 = scalar_lea.vmem [#allocation2], %s222
        %p224 = pneg %p43
        %p225 = pneg %p40
        %p226 = pneg %p64
        %p227 = pneg %p61
        %p228 = pneg %p85
        %p229 = pneg %p82
        %p230 = pneg %p106
        %p231 = pneg %p103
        %p232 = pneg %p127
        %p233 = pneg %p124
        %p234 = pneg %p153
        %p235 = pneg %p150
        %s236 = sand.u32 %s140, 1
        %s237 = scalar_lea.sflag [#allocation4], %s236
        %s238 = sand.u32 %s140, 1
        %s239 = smul.addr %s238, 16
        %s240 = scalar_lea.vmem [#allocation5], %s239
        %v241 = vld [vmem:[%s214] sm:$0xff]
        %v242 = vld [vmem:[%s1] sm:$0xf]
        %244 = vset.pattern.permute.xlu0 0
        %245 = vperm.xlu0 %244, %v242
        %v246 = vpop.permute.xlu0 %245
        %v249 = vlaneseq
        %v250 = vshrl.u32 %v249, 7
        %v251 = vsub.s32 0, %v250
        %v252 = vrot.slane %v241, %v251
        %v253 = vlaneseq
        %v254 = vshrl.u32 %v253, 7
        %v255 = vsub.s32 4, %v254
        %v256 = vrot.slane %v241, %v255
        %v259 = vlaneseq
        %v260 = vshrl.u32 %v259, 7
        %v261 = vsub.s32 0, %v260
        %v262 = vrot.slane %v252, %v261
        %v263 = vlaneseq
        %v264 = vshrl.u32 %v263, 7
        %v265 = vsub.s32 0, %v264
        %v266 = vrot.slane %v256, %v265
        %v267 = vmul.f32 %v246, %v262
        %v268 = vmul.f32 %v246, %v266
        %269 = vset.pattern.permute.xlu0 1
        %270 = vperm.xlu0 %269, %v242
        %v271 = vpop.permute.xlu0 %270
        %v273 = vlaneseq
        %v274 = vshrl.u32 %v273, 7
        %v275 = vsub.s32 1, %v274
        %v276 = vrot.slane %v241, %v275
        %v277 = vlaneseq
        %v278 = vshrl.u32 %v277, 7
        %v279 = vsub.s32 5, %v278
        %v280 = vrot.slane %v241, %v279
        %v283 = vlaneseq
        %v284 = vshrl.u32 %v283, 7
        %v285 = vsub.s32 1, %v284
        %v286 = vrot.slane %v276, %v285
        %v287 = vlaneseq
        %v288 = vshrl.u32 %v287, 7
        %v289 = vsub.s32 1, %v288
        %v290 = vrot.slane %v280, %v289
        %v291 = vmul.f32 %v271, %v286
        %v292 = vmul.f32 %v271, %v290
        %v293 = vadd.f32 %v267, %v291
        %v294 = vadd.f32 %v268, %v292
        %295 = vset.pattern.permute.xlu0 2
        %296 = vperm.xlu0 %295, %v242
        %v297 = vpop.permute.xlu0 %296
        %v299 = vlaneseq
        %v300 = vshrl.u32 %v299, 7
        %v301 = vsub.s32 2, %v300
        %v302 = vrot.slane %v241, %v301
        %v303 = vlaneseq
        %v304 = vshrl.u32 %v303, 7
        %v305 = vsub.s32 6, %v304
        %v306 = vrot.slane %v241, %v305
        %v309 = vlaneseq
        %v310 = vshrl.u32 %v309, 7
        %v311 = vsub.s32 2, %v310
        %v312 = vrot.slane %v302, %v311
        %v313 = vlaneseq
        %v314 = vshrl.u32 %v313, 7
        %v315 = vsub.s32 2, %v314
        %v316 = vrot.slane %v306, %v315
        %v317 = vmul.f32 %v297, %v312
        %v318 = vmul.f32 %v297, %v316
        %v319 = vadd.f32 %v293, %v317
        %v320 = vadd.f32 %v294, %v318
        %321 = vset.pattern.permute.xlu0 3
        %322 = vperm.xlu0 %321, %v242
        %v323 = vpop.permute.xlu0 %322
        %v325 = vlaneseq
        %v326 = vshrl.u32 %v325, 7
        %v327 = vsub.s32 3, %v326
        %v328 = vrot.slane %v241, %v327
        %v329 = vlaneseq
        %v330 = vshrl.u32 %v329, 7
        %v331 = vsub.s32 7, %v330
        %v332 = vrot.slane %v241, %v331
        %v335 = vlaneseq
        %v336 = vshrl.u32 %v335, 7
        %v337 = vsub.s32 3, %v336
        %v338 = vrot.slane %v328, %v337
        %v339 = vlaneseq
        %v340 = vshrl.u32 %v339, 7
        %v341 = vsub.s32 3, %v340
        %v342 = vrot.slane %v332, %v341
        %v343 = vmul.f32 %v323, %v338
        %v344 = vmul.f32 %v323, %v342
        %v345 = vadd.f32 %v319, %v343
        %v346 = vadd.f32 %v320, %v344
        %v347 = vld [vmem:[%s2] sm:$0xf]
        %349 = vset.pattern.permute.xlu0 0
        %350 = vperm.xlu0 %349, %v347
        %v351 = vpop.permute.xlu0 %350
        %v353 = vadd.f32 %v345, %v351
        %v354 = vadd.f32 %v346, %v351
        %v355 = vmax.f32 %v353, 0.0
        %v356 = vmax.f32 %v354, 0.0
        %v357 = vlaneseq
        %v358 = vand.u32 %v357, 127
        %v359 = vadd.s32 %v358, 128
        %v360 = vand.u32 %v358, 15
        %v361 = vand.u32 %v359, 15
        %vm362 = vcmp.ge.s32.totalorder %v360, 1
        %vm363 = vcmp.ge.s32.totalorder %v361, 1
        %364 = vrot.lane.b32.xlu0 %v355, 1
        %v365 = vpop.permute.xlu0 %364
        %366 = vrot.lane.b32.xlu0 %v356, 1
        %v367 = vpop.permute.xlu0 %366
        %vm368 = vcmp.lt.s32.totalorder %v358, 1
        %v369 = vsel %vm368, %v365, %v367
        %v370 = vsel %vm368, %v367, %v365
        %v371 = vsel %vm362, %v370, 0.0
        %v372 = vsel %vm363, %v369, 0.0
        %vm373 = vcmp.lt.s32.totalorder %v360, 15
        %vm374 = vcmp.lt.s32.totalorder %v361, 15
        %375 = vrot.lane.b32.xlu0 %v355, 127
        %v376 = vpop.permute.xlu0 %375
        %377 = vrot.lane.b32.xlu0 %v356, 127
        %v378 = vpop.permute.xlu0 %377
        %vm379 = vcmp.lt.s32.totalorder %v358, 127
        %v380 = vsel %vm379, %v376, %v378
        %v381 = vsel %vm379, %v378, %v376
        %v382 = vsel %vm373, %v380, 0.0
        %v383 = vsel %vm374, %v381, 0.0
        %vm384 = vcmp.ge.s32.totalorder %v358, 16
        %vm385 = vcmp.ge.s32.totalorder %v359, 16
        %vm386 = vcmp.lt.s32.totalorder %v358, 240
        %vm387 = vcmp.lt.s32.totalorder %v359, 240
        %v388 = vld [vmem:[%s3] sm:$0xf]
        %390 = vset.pattern.permute.xlu0 0
        %391 = vperm.xlu0 %390, %v388
        %v392 = vpop.permute.xlu0 %391
        %v394 = vmul.f32 %v392, %v371
        %v395 = vmul.f32 %v392, %v372
        %396 = vset.pattern.permute.xlu0 1
        %397 = vperm.xlu0 %396, %v388
        %v398 = vpop.permute.xlu0 %397
        %v400 = vmul.f32 %v398, %v355
        %v401 = vmul.f32 %v398, %v356
        %v402 = vadd.f32 %v394, %v400
        %v403 = vadd.f32 %v395, %v401
        %404 = vset.pattern.permute.xlu0 2
        %405 = vperm.xlu0 %404, %v388
        %v406 = vpop.permute.xlu0 %405
        %v408 = vmul.f32 %v406, %v382
        %v409 = vmul.f32 %v406, %v383
        %v410 = vadd.f32 %v402, %v408
        %v411 = vadd.f32 %v403, %v409
        %412 = vrot.lane.b32.xlu0 %v410, 16
        %v413 = vpop.permute.xlu0 %412
        %414 = vrot.lane.b32.xlu0 %v411, 16
        %v415 = vpop.permute.xlu0 %414
        %vm416 = vcmp.lt.s32.totalorder %v358, 16
        %v417 = vsel %vm416, %v413, %v415
        %v418 = vsel %vm416, %v415, %v413
        %v419 = vsel %vm384, %v418, 0.0
        %v420 = vsel %vm385, %v417, 0.0
        %421 = vset.pattern.permute.xlu0 3
        %422 = vperm.xlu0 %421, %v388
        %v423 = vpop.permute.xlu0 %422
        %v425 = vmul.f32 %v423, %v371
        %v426 = vmul.f32 %v423, %v372
        %427 = vset.pattern.permute.xlu0 4
        %428 = vperm.xlu0 %427, %v388
        %v429 = vpop.permute.xlu0 %428
        %v431 = vmul.f32 %v429, %v355
        %v432 = vmul.f32 %v429, %v356
        %v433 = vadd.f32 %v425, %v431
        %v434 = vadd.f32 %v426, %v432
        %435 = vset.pattern.permute.xlu0 5
        %436 = vperm.xlu0 %435, %v388
        %v437 = vpop.permute.xlu0 %436
        %v439 = vmul.f32 %v437, %v382
        %v440 = vmul.f32 %v437, %v383
        %v441 = vadd.f32 %v433, %v439
        %v442 = vadd.f32 %v434, %v440
        %v443 = vadd.f32 %v419, %v441
        %v444 = vadd.f32 %v420, %v442
        %445 = vset.pattern.permute.xlu0 6
        %446 = vperm.xlu0 %445, %v388
        %v447 = vpop.permute.xlu0 %446
        %v449 = vmul.f32 %v447, %v371
        %v450 = vmul.f32 %v447, %v372
        %451 = vset.pattern.permute.xlu0 7
        %452 = vperm.xlu0 %451, %v388
        %v453 = vpop.permute.xlu0 %452
        %v455 = vmul.f32 %v453, %v355
        %v456 = vmul.f32 %v453, %v356
        %v457 = vadd.f32 %v449, %v455
        %v458 = vadd.f32 %v450, %v456
        %459 = vset.pattern.permute.xlu0 8
        %460 = vperm.xlu0 %459, %v388
        %v461 = vpop.permute.xlu0 %460
        %v463 = vmul.f32 %v461, %v382
        %v464 = vmul.f32 %v461, %v383
        %v465 = vadd.f32 %v457, %v463
        %v466 = vadd.f32 %v458, %v464
        %467 = vrot.lane.b32.xlu0 %v465, 112
        %v468 = vpop.permute.xlu0 %467
        %469 = vrot.lane.b32.xlu0 %v466, 112
        %v470 = vpop.permute.xlu0 %469
        %vm471 = vcmp.lt.s32.totalorder %v358, 112
        %v472 = vsel %vm471, %v468, %v470
        %v473 = vsel %vm471, %v470, %v468
        %v474 = vsel %vm386, %v472, 0.0
        %v475 = vsel %vm387, %v473, 0.0
        %v476 = vadd.f32 %v443, %v474
        %v477 = vadd.f32 %v444, %v475
        %v478 = vld [vmem:[%s4] sm:$0xf]
        %480 = vset.pattern.permute.xlu0 0
        %481 = vperm.xlu0 %480, %v478
        %v482 = vpop.permute.xlu0 %481
        %v484 = vadd.f32 %v476, %v482
        %v485 = vadd.f32 %v477, %v482
        %v486 = vmax.f32 %v484, 0.0
        %v487 = vmax.f32 %v485, 0.0
        %v490 = vrot.slane %v486, 4
        %v491 = vrot.slane %v487, 4
        %vm494 = vcmask 1043456
        %v495 = vsel %vm494, %v355, %v490
        %v496 = vsel %vm494, %v356, %v491
        %497 = vst [vmem:[%s240] sm:$0xff] %v495
        %498 = vst [vmem:[%s240 + $0x8] sm:$0xff] %v496
        %s499 = sand.u32 %s140, 1
        %s500 = scalar_lea.sflag [#allocation4], %s499
        %s501 = sand.u32 %s140, 1
        %s502 = smul.addr %s501, 16
        %s503 = scalar_lea.vmem [#allocation5], %s502
        // Predicated region
        $region45: #{tpu_custom_call.1} parent=39 // pred_check
          %p504 = pneg %p150
        $region46: #{tpu_custom_call.1} parent=39 // pred_check_branch
          %506 = sbr.rel (%p504) target = $region48
        $region47: #{tpu_custom_call.1} parent=39 // pred_region
          %s508 = ssub.s32 256, 256
          %509 = vsyncadd %s500, %s508
          %s510 = smul.addr %s22, 2
          %s511 = smul.addr %s510, 128
          %s512 = scalar_lea.hbm %s5, %s511
          %s514 = sshll.u32 %s503, 4
          %s515 = int_to_ptr.vmem [resolvable:$true] %s514
          %517 = dma.vmem_to_hbm [thread:$0]  %s515, 256, %s512, %s500
        $region48: #{tpu_custom_call.1} parent=39 // pred_fallthru
          _
      $region40: #{tpu_custom_call.1} parent=5 // pred_fallthru
        _
      %p518 = scmp.le.s32.totalorder 2, %s17
      // Predicated region
      $region49: #{tpu_custom_call.1} parent=5 // pred_check
        %p519 = pneg %p518
      $region50: #{tpu_custom_call.1} parent=5 // pred_check_branch
        %521 = sbr.rel (%p519) target = $region52
      $region51: #{tpu_custom_call.1} parent=5 // pred_region
        %s522 = ssub.s32 %s17, 2
        // Predicated region
        $region53: #{tpu_custom_call.1} parent=51 // pred_check
          %p523 = pneg %p156
        $region54: #{tpu_custom_call.1} parent=51 // pred_check_branch
          %525 = sbr.rel (%p523) target = $region56
        $region55: #{tpu_custom_call.1} parent=51 // pred_region
          %s526 = sand.u32 %s141, 1
          %s527 = scalar_lea.sflag [#allocation4], %s526
          %s528 = sand.u32 %s141, 1
          %s529 = smul.addr %s528, 16
          %s530 = scalar_lea.vmem [#allocation5], %s529
          %531 = dma.done %s527, 256
        $region56: #{tpu_custom_call.1} parent=51 // pred_fallthru
          _
      $region52: #{tpu_custom_call.1} parent=5 // pred_fallthru
        _
    $region6: #{tpu_custom_call.1} parent=1 // loop_footer
      %s21 = sadd.s32 1, %s17
    $region7: #{tpu_custom_call.1} parent=1 // loop_footer_branch
      %16 = sbr.rel target = $region3
    $region8: #{tpu_custom_call.1} parent=1 // loop_exit
      _
    %532 = vsyncpa [#allocation3], 1
    %s533 = scalar_lea.sflag [#allocation3], 1
    %534 = vsyncpa %s533, 1
    %535 = vsyncpa [#allocation4], 1
    %s536 = scalar_lea.sflag [#allocation4], 1
    %537 = vsyncpa %s536, 1

</llo_original>
